<compile_context>
chip_gen: v6e
topology: v6e:2x2x1
jax: 0.10.0
libtpu: 0.0.40
codegen_flags: <defaults>
</compile_context>

<pallas_src>
import functools

import jax
import jax.numpy as jnp
from jax.experimental import pallas as pl
from jax.experimental.pallas import tpu as pltpu


def _round_up(n, m):
    return ((n + m - 1) // m) * m


def _vae_kernel(x_ref, eps_ref,
                w1_ref, b1_ref,
                w2_ref, b2_ref,
                w3_ref, b3_ref,
                w4_ref, b4_ref,
                recon_ref, enc_ref,
                *, latent_dim):
    f32 = jnp.float32
    bf16 = jnp.bfloat16

    # encoder: Linear(input_dim, 128) + ReLU       (bf16 MXU, f32 accumulate)
    h = jnp.dot(x_ref[...], w1_ref[...], preferred_element_type=f32) + b1_ref[...]
    h = jnp.maximum(h, 0.0)

    # encoder layer 2: one fused matmul producing [mu | log_var] (PyTorch column
    # order, zero-padded to a single lane-aligned block) -> one lane-dense store.
    enc = jnp.dot(h.astype(bf16), w2_ref[...], preferred_element_type=f32) + b2_ref[...]
    enc_ref[...] = enc

    # reparameterize with no lane shuffling:
    #   mu lives at lanes [0, latent), log_var at [latent, 2*latent);
    #   eps was pre-placed (wrapper) on the log_var lanes, zero elsewhere;
    #   W3 is replicated on rows [0,latent) and [latent,2*latent), so
    #   z_big @ W3 == (mu + eps*std) @ W3 exactly.
    lane = jax.lax.broadcasted_iota(jnp.int32, enc.shape, dimension=1)
    is_mu = lane < latent_dim
    mu_part = jnp.where(is_mu, enc, 0.0)
    std = jnp.exp(0.5 * jnp.where(is_mu, 0.0, enc))      # EUP exp; mu lanes -> 1
    z_big = mu_part + eps_ref[...].astype(f32) * std     # eps padding zeroes the rest

    # decoder: Linear(latent, 128) + ReLU + Linear(128, input_dim) + Sigmoid
    d = jnp.dot(z_big.astype(bf16), w3_ref[...], preferred_element_type=f32) + b3_ref[...]
    d = jnp.maximum(d, 0.0)
    logits = jnp.dot(d.astype(bf16), w4_ref[...], preferred_element_type=f32) + b4_ref[...]
    recon_ref[...] = 1.0 / (1.0 + jnp.exp(-logits))      # exact sigmoid, stays in [0,1]


def prepare_params(params, input_dim, latent_dim, hidden=128):
    """One-time weight prep: lane padding, (in, out) layout, bf16 MXU weights.

    Call once at init and reuse the result across forward calls; nothing here
    should run in the hot loop.
    """
    Dp = _round_up(input_dim, 128)
    Hp = _round_up(hidden, 128)
    Lp2 = _round_up(2 * latent_dim, 128)
    f32, bf16 = jnp.float32, jnp.bfloat16

    w1 = jnp.zeros((Dp, Hp), f32).at[:input_dim, :hidden].set(params["w1"])
    b1 = jnp.zeros((1, Hp), f32).at[0, :hidden].set(params["b1"])

    # fused [mu | log_var]: same column order as the PyTorch layer, zero-padded.
    w2 = jnp.zeros((Hp, Lp2), f32).at[:hidden, :2 * latent_dim].set(params["w2"])
    b2 = jnp.zeros((1, Lp2), f32).at[0, :2 * latent_dim].set(params["b2"])

    # decoder first layer: W3 replicated onto the mu rows and the (eps*std) rows.
    w3 = jnp.zeros((Lp2, Hp), f32)
    w3 = w3.at[:latent_dim, :hidden].set(params["w3"])
    w3 = w3.at[latent_dim:2 * latent_dim, :hidden].set(params["w3"])
    b3 = jnp.zeros((1, Hp), f32).at[0, :hidden].set(params["b3"])

    w4 = jnp.zeros((Hp, Dp), f32).at[:hidden, :input_dim].set(params["w4"])
    b4 = jnp.zeros((1, Dp), f32).at[0, :input_dim].set(params["b4"])

    return dict(
        input_dim=input_dim, latent_dim=latent_dim, hidden=hidden,
        Dp=Dp, Hp=Hp, Lp2=Lp2,
        w1=w1.astype(bf16), b1=b1,
        w2=w2.astype(bf16), b2=b2,
        w3=w3.astype(bf16), b3=b3,
        w4=w4.astype(bf16), b4=b4,
    )


def vae_forward(x, eps, prepared, *, batch_tile=1024):
    """x: (B, input_dim), eps: (B, latent_dim).  Returns (recon, mu, log_var).

    batch_tile: rows per grid step.  It is auto-shrunk to a ~24 MiB double-
    buffered VMEM budget and to keep >= 2 grid steps (so both v7x TensorCores
    get work).  Note: v7x has the *smallest* VMEM (64 MiB physical / 32 MiB
    scoped default) and v5e the smallest scoped default (16 MiB, raised here via
    vmem_limit_bytes); bf16 activation I/O keeps 1024-row tiles inside all
    three budgets for input_dim up to a few thousand.

    Pre-padded bf16 inputs of shape (Bp, Dp) / (Bp, Lp2) are passed straight
    through with no per-call pad copy.
    """
    input_dim = prepared["input_dim"]
    latent_dim = prepared["latent_dim"]
    Dp, Hp, Lp2 = prepared["Dp"], prepared["Hp"], prepared["Lp2"]
    B = x.shape[0]
    f32, bf16 = jnp.float32, jnp.bfloat16

    # ---- batch tile selection --------------------------------------------
    TB = min(batch_tile, _round_up(B, 16))            # bf16 tiles: multiple of 16
    # keep >= 2 (ideally 4) grid steps so both v7x TensorCores get work
    if B >= 64:
        TB = min(TB, _round_up(-(-B // 4), 16))
    elif B >= 32:
        TB = min(TB, _round_up(-(-B // 2), 16))

    def tile_vmem(tb):                                 # rough double-buffered bytes
        io = tb * (Dp * 2 + Lp2 * 2 + Dp * 4 + Lp2 * 4)   # x, eps, recon, enc tiles
        scratch = tb * Hp * 4 * 2                         # h / d f32 temporaries
        return 2 * io + scratch

    while TB > 16 and tile_vmem(TB) > (24 << 20):
        TB = max(16, _round_up(TB // 2, 16))
    TB = max(16, TB)
    Bp = _round_up(B, TB)
    grid = (Bp // TB,)

    # ---- inputs: bf16, lane/batch padded (pre-padded inputs pass through) --
    if x.shape == (Bp, Dp) and x.dtype == bf16:
        xp = x
    else:
        xp = jnp.zeros((Bp, Dp), bf16).at[:B, :input_dim].set(x.astype(bf16))
    if eps.shape == (Bp, Lp2) and eps.dtype == bf16:
        epsp = eps
    else:
        # eps is placed on the log_var lanes [latent, 2*latent): see kernel.
        epsp = jnp.zeros((Bp, Lp2), bf16).at[:B, latent_dim:2 * latent_dim].set(
            eps.astype(bf16))
    # TODO(synk): eps could instead be generated in-kernel with
    # pltpu.prng_seed/prng_random_bits to drop this input stream entirely.

    # ---- specs ------------------------------------------------------------
    def batch_spec(nlanes):                  # activations: pipelined over the grid
        return pl.BlockSpec((TB, nlanes), lambda i: (i, 0))

    def resident_spec(shape):                # weights/biases: VMEM-resident
        # TODO(synk): pipeline_mode=pl.Buffered(1) would single-buffer these on
        # v7x's tighter VMEM; left at the default to keep lowering conservative.
        return pl.BlockSpec(shape, lambda i: (0, 0))

    in_specs = [
        batch_spec(Dp),                      # x (bf16)
        batch_spec(Lp2),                     # eps (bf16, on the log_var lanes)
        resident_spec((Dp, Hp)), resident_spec((1, Hp)),      # w1, b1
        resident_spec((Hp, Lp2)), resident_spec((1, Lp2)),    # w2, b2 (fused)
        resident_spec((Lp2, Hp)), resident_spec((1, Hp)),     # w3, b3
        resident_spec((Hp, Dp)), resident_spec((1, Dp)),      # w4, b4
    ]
    out_shapes = (
        jax.ShapeDtypeStruct((Bp, Dp), f32),    # reconstruction (padded)
        jax.ShapeDtypeStruct((Bp, Lp2), f32),   # fused [mu | log_var] (padded)
    )
    out_specs = (batch_spec(Dp), batch_spec(Lp2))

    flops = 2 * Bp * (Dp * Hp + Hp * Lp2 + Lp2 * Hp + Hp * Dp)
    bytes_accessed = (
        xp.size * 2 + epsp.size * 2                        # bf16 activation reads
        + Bp * (Dp + Lp2) * 4                              # f32 outputs
        + 2 * (Dp * Hp + Hp * Lp2 + Lp2 * Hp + Hp * Dp)    # bf16 weights
        + 4 * (2 * Hp + Lp2 + Dp))                         # f32 biases
    transcendentals = Bp * (Lp2 + Dp)                      # reparam exp + sigmoid exp

    kernel = functools.partial(_vae_kernel, latent_dim=latent_dim)

    recon_p, enc_p = pl.pallas_call(
        kernel,
        grid=grid,
        out_shape=out_shapes,
        in_specs=in_specs,
        out_specs=out_specs,
        compiler_params=pltpu.CompilerParams(
            dimension_semantics=("parallel",),       # shard batch across TCs (v7x)
            vmem_limit_bytes=32 * 1024 * 1024,       # covers v5e's 16 MiB default
        ),
        cost_estimate=pl.CostEstimate(
            flops=flops,
            transcendentals=transcendentals,
            bytes_accessed=bytes_accessed),
    )(xp, epsp,
      prepared["w1"], prepared["b1"], prepared["w2"], prepared["b2"],
      prepared["w3"], prepared["b3"], prepared["w4"], prepared["b4"])

    recon = recon_p[:B, :input_dim]
    mu = enc_p[:B, :latent_dim]
    log_var = enc_p[:B, latent_dim:2 * latent_dim]
    return recon, mu, log_var


def init_vae_params(key, input_dim, latent_dim, hidden=128):
    """Deterministic init mimicking PyTorch nn.Linear default (uniform +-1/sqrt(fan_in)).
    Weights are stored already transposed: (in_features, out_features)."""
    ks = jax.random.split(key, 8)

    def lin(kw, kb, fan_in, fan_out):
        bound = 1.0 / jnp.sqrt(fan_in)
        w = jax.random.uniform(kw, (fan_in, fan_out), jnp.float32, -bound, bound)
        b = jax.random.uniform(kb, (fan_out,), jnp.float32, -bound, bound)
        return w, b

    w1, b1 = lin(ks[0], ks[1], input_dim, hidden)
    w2, b2 = lin(ks[2], ks[3], hidden, latent_dim * 2)
    w3, b3 = lin(ks[4], ks[5], latent_dim, hidden)
    w4, b4 = lin(ks[6], ks[7], hidden, input_dim)
    return dict(w1=w1, b1=b1, w2=w2, b2=b2, w3=w3, b3=b3, w4=w4, b4=b4)


def vae_reference(x, eps, params, *, mxu_bf16=True):
    """Pure-JAX reference of the PyTorch forward.

    With mxu_bf16=True it mimics the kernel's numerics (bf16 matmul inputs and
    bf16 eps, f32 accumulation) so tolerances can stay tight; with
    mxu_bf16=False it is the exact f32 PyTorch semantics.
    """
    latent_dim = eps.shape[1]

    def mm(a, w):
        if mxu_bf16:
            return jnp.dot(a.astype(jnp.bfloat16), w.astype(jnp.bfloat16),
                           preferred_element_type=jnp.float32)
        return jnp.dot(a, w)

    e = eps.astype(jnp.bfloat16).astype(jnp.float32) if mxu_bf16 else eps
    h = jnp.maximum(mm(x, params["w1"]) + params["b1"], 0.0)
    enc = mm(h, params["w2"]) + params["b2"]
    mu, lv = enc[:, :latent_dim], enc[:, latent_dim:]
    z = mu + e * jnp.exp(0.5 * lv)
    d = jnp.maximum(mm(z, params["w3"]) + params["b3"], 0.0)
    recon = jax.nn.sigmoid(mm(d, params["w4"]) + params["b4"])
    return recon, mu, lv


if __name__ == "__main__":
    B, INPUT_DIM, LATENT_DIM = 8, 32, 16

    key = jax.random.PRNGKey(0)
    k_params, k_x, k_eps = jax.random.split(key, 3)

    params = init_vae_params(k_params, INPUT_DIM, LATENT_DIM)
    prepared = prepare_params(params, INPUT_DIM, LATENT_DIM)   # one-time weight prep

    x = jax.random.normal(k_x, (B, INPUT_DIM), jnp.float32)
    # torch.randn_like(std) is the stochastic part; generated deterministically here.
    eps = jax.random.normal(k_eps, (B, LATENT_DIM), jnp.float32)

    recon, mu, log_var = vae_forward(x, eps, prepared)
    jax.block_until_ready((recon, mu, log_var))

    r_recon, r_mu, r_lv = vae_reference(x, eps, params, mxu_bf16=True)
    assert recon.shape == (B, INPUT_DIM) and mu.shape == (B, LATENT_DIM)
    assert jnp.allclose(mu, r_mu, atol=2e-3), "mu mismatch"
    assert jnp.allclose(log_var, r_lv, atol=2e-3), "log_var mismatch"
    assert jnp.allclose(recon, r_recon, atol=1e-2), "recon mismatch"
    assert bool(jnp.all((recon >= 0.0) & (recon <= 1.0))), "recon out of [0,1]"

    print("KERNEL_OK")
</pallas_src>

<mosaic_0001>
module attributes {stable_mosaic.version = 11 : i64} {
  func.func @_vae_kernel(%arg0: i32, %arg1: memref<16x128xbf16, #tpu.memory_space<vmem>>, %arg2: memref<16x128xbf16, #tpu.memory_space<vmem>>, %arg3: memref<128x128xbf16, #tpu.memory_space<vmem>>, %arg4: memref<1x128xf32, #tpu.memory_space<vmem>>, %arg5: memref<128x128xbf16, #tpu.memory_space<vmem>>, %arg6: memref<1x128xf32, #tpu.memory_space<vmem>>, %arg7: memref<128x128xbf16, #tpu.memory_space<vmem>>, %arg8: memref<1x128xf32, #tpu.memory_space<vmem>>, %arg9: memref<128x128xbf16, #tpu.memory_space<vmem>>, %arg10: memref<1x128xf32, #tpu.memory_space<vmem>>, %arg11: memref<16x128xf32, #tpu.memory_space<vmem>>, %arg12: memref<16x128xf32, #tpu.memory_space<vmem>>) attributes {dimension_semantics = [#tpu.dimension_semantics<parallel>], iteration_bounds = array<i64: 1>, scalar_prefetch = 0 : i64, scratch_operands = 0 : i64, tpu.core_type = #tpu.core_type<tc>, window_params = [{transform_indices = @transform_0, window_bounds = array<i64: 16, 128>}, {transform_indices = @transform_1, window_bounds = array<i64: 16, 128>}, {pipeline_mode = #tpu.pipeline_mode<synchronous>, transform_indices = @transform_2, window_bounds = array<i64: 128, 128>}, {pipeline_mode = #tpu.pipeline_mode<synchronous>, transform_indices = @transform_3, window_bounds = array<i64: 1, 128>}, {pipeline_mode = #tpu.pipeline_mode<synchronous>, transform_indices = @transform_4, window_bounds = array<i64: 128, 128>}, {pipeline_mode = #tpu.pipeline_mode<synchronous>, transform_indices = @transform_5, window_bounds = array<i64: 1, 128>}, {pipeline_mode = #tpu.pipeline_mode<synchronous>, transform_indices = @transform_6, window_bounds = array<i64: 128, 128>}, {pipeline_mode = #tpu.pipeline_mode<synchronous>, transform_indices = @transform_7, window_bounds = array<i64: 1, 128>}, {pipeline_mode = #tpu.pipeline_mode<synchronous>, transform_indices = @transform_8, window_bounds = array<i64: 128, 128>}, {pipeline_mode = #tpu.pipeline_mode<synchronous>, transform_indices = @transform_9, window_bounds = array<i64: 1, 128>}, {transform_indices = @transform_10, window_bounds = array<i64: 16, 128>}, {transform_indices = @transform_11, window_bounds = array<i64: 16, 128>}]} {
    %c0 = arith.constant 0 : index
    %c0_0 = arith.constant 0 : index
    %0 = vector.load %arg1[%c0, %c0_0] : memref<16x128xbf16, #tpu.memory_space<vmem>>, vector<16x128xbf16>
    %c0_1 = arith.constant 0 : index
    %c0_2 = arith.constant 0 : index
    %1 = vector.load %arg3[%c0_1, %c0_2] : memref<128x128xbf16, #tpu.memory_space<vmem>>, vector<128x128xbf16>
    %cst = arith.constant dense<0.000000e+00> : vector<16x128xf32>
    %2 = tpu.matmul %0, %1, %cst {dimension_numbers = #tpu.dot_dimension_numbers<[1], [0], [0], [1], [0, 0, 1, 1], [], []>} : vector<16x128xbf16>, vector<128x128xbf16>, vector<16x128xf32> -> vector<16x128xf32>
    %c0_3 = arith.constant 0 : index
    %c0_4 = arith.constant 0 : index
    %3 = vector.load %arg4[%c0_3, %c0_4] : memref<1x128xf32, #tpu.memory_space<vmem>>, vector<1x128xf32>
    %4 = vector.broadcast %3 : vector<1x128xf32> to vector<16x128xf32>
    %5 = arith.addf %2, %4 : vector<16x128xf32>
    %cst_5 = arith.constant 0.000000e+00 : f32
    %6 = vector.broadcast %cst_5 : f32 to vector<16x128xf32>
    %7 = arith.maximumf %5, %6 : vector<16x128xf32>
    %8 = arith.truncf %7 : vector<16x128xf32> to vector<16x128xbf16>
    %c0_6 = arith.constant 0 : index
    %c0_7 = arith.constant 0 : index
    %9 = vector.load %arg5[%c0_6, %c0_7] : memref<128x128xbf16, #tpu.memory_space<vmem>>, vector<128x128xbf16>
    %cst_8 = arith.constant dense<0.000000e+00> : vector<16x128xf32>
    %10 = tpu.matmul %8, %9, %cst_8 {dimension_numbers = #tpu.dot_dimension_numbers<[1], [0], [0], [1], [0, 0, 1, 1], [], []>} : vector<16x128xbf16>, vector<128x128xbf16>, vector<16x128xf32> -> vector<16x128xf32>
    %c0_9 = arith.constant 0 : index
    %c0_10 = arith.constant 0 : index
    %11 = vector.load %arg6[%c0_9, %c0_10] : memref<1x128xf32, #tpu.memory_space<vmem>>, vector<1x128xf32>
    %12 = vector.broadcast %11 : vector<1x128xf32> to vector<16x128xf32>
    %13 = arith.addf %10, %12 : vector<16x128xf32>
    %c0_11 = arith.constant 0 : index
    %c0_12 = arith.constant 0 : index
    %14 = vector.load %arg12[%c0_11, %c0_12] : memref<16x128xf32, #tpu.memory_space<vmem>>, vector<16x128xf32>
    tpu.vector_store %arg12[%c0_11, %c0_12], %13 {strides = array<i32>} : memref<16x128xf32, #tpu.memory_space<vmem>>, vector<16x128xf32>,
    %15 = tpu.iota {dimensions = array<i32: 1>} : vector<16x128xi32>
    %c16_i32 = arith.constant 16 : i32
    %16 = vector.broadcast %c16_i32 : i32 to vector<16x128xi32>
    %17 = arith.cmpi slt, %15, %16 : vector<16x128xi32>
    %cst_13 = arith.constant 0.000000e+00 : f32
    %18 = vector.broadcast %cst_13 : f32 to vector<16x128xf32>
    %19 = arith.select %17, %13, %18 : vector<16x128xi1>, vector<16x128xf32>
    %cst_14 = arith.constant 0.000000e+00 : f32
    %20 = vector.broadcast %cst_14 : f32 to vector<16x128xf32>
    %21 = arith.select %17, %20, %13 : vector<16x128xi1>, vector<16x128xf32>
    %cst_15 = arith.constant 5.000000e-01 : f32
    %22 = vector.broadcast %cst_15 : f32 to vector<16x128xf32>
    %23 = arith.mulf %22, %21 : vector<16x128xf32>
    %24 = math.exp %23 : vector<16x128xf32>
    %c0_16 = arith.constant 0 : index
    %c0_17 = arith.constant 0 : index
    %25 = vector.load %arg2[%c0_16, %c0_17] : memref<16x128xbf16, #tpu.memory_space<vmem>>, vector<16x128xbf16>
    %26 = arith.extf %25 : vector<16x128xbf16> to vector<16x128xf32>
    %27 = arith.mulf %26, %24 : vector<16x128xf32>
    %28 = arith.addf %19, %27 : vector<16x128xf32>
    %29 = arith.truncf %28 : vector<16x128xf32> to vector<16x128xbf16>
    %c0_18 = arith.constant 0 : index
    %c0_19 = arith.constant 0 : index
    %30 = vector.load %arg7[%c0_18, %c0_19] : memref<128x128xbf16, #tpu.memory_space<vmem>>, vector<128x128xbf16>
    %cst_20 = arith.constant dense<0.000000e+00> : vector<16x128xf32>
    %31 = tpu.matmul %29, %30, %cst_20 {dimension_numbers = #tpu.dot_dimension_numbers<[1], [0], [0], [1], [0, 0, 1, 1], [], []>} : vector<16x128xbf16>, vector<128x128xbf16>, vector<16x128xf32> -> vector<16x128xf32>
    %c0_21 = arith.constant 0 : index
    %c0_22 = arith.constant 0 : index
    %32 = vector.load %arg8[%c0_21, %c0_22] : memref<1x128xf32, #tpu.memory_space<vmem>>, vector<1x128xf32>
    %33 = vector.broadcast %32 : vector<1x128xf32> to vector<16x128xf32>
    %34 = arith.addf %31, %33 : vector<16x128xf32>
    %cst_23 = arith.constant 0.000000e+00 : f32
    %35 = vector.broadcast %cst_23 : f32 to vector<16x128xf32>
    %36 = arith.maximumf %34, %35 : vector<16x128xf32>
    %37 = arith.truncf %36 : vector<16x128xf32> to vector<16x128xbf16>
    %c0_24 = arith.constant 0 : index
    %c0_25 = arith.constant 0 : index
    %38 = vector.load %arg9[%c0_24, %c0_25] : memref<128x128xbf16, #tpu.memory_space<vmem>>, vector<128x128xbf16>
    %cst_26 = arith.constant dense<0.000000e+00> : vector<16x128xf32>
    %39 = tpu.matmul %37, %38, %cst_26 {dimension_numbers = #tpu.dot_dimension_numbers<[1], [0], [0], [1], [0, 0, 1, 1], [], []>} : vector<16x128xbf16>, vector<128x128xbf16>, vector<16x128xf32> -> vector<16x128xf32>
    %c0_27 = arith.constant 0 : index
    %c0_28 = arith.constant 0 : index
    %40 = vector.load %arg10[%c0_27, %c0_28] : memref<1x128xf32, #tpu.memory_space<vmem>>, vector<1x128xf32>
    %41 = vector.broadcast %40 : vector<1x128xf32> to vector<16x128xf32>
    %42 = arith.addf %39, %41 : vector<16x128xf32>
    %cst_29 = arith.constant 0.000000e+00 : f32
    %43 = vector.broadcast %cst_29 : f32 to vector<16x128xf32>
    %44 = arith.subf %43, %42 : vector<16x128xf32>
    %45 = math.exp %44 : vector<16x128xf32>
    %cst_30 = arith.constant 1.000000e+00 : f32
    %46 = vector.broadcast %cst_30 : f32 to vector<16x128xf32>
    %47 = arith.addf %46, %45 : vector<16x128xf32>
    %cst_31 = arith.constant 1.000000e+00 : f32
    %48 = vector.broadcast %cst_31 : f32 to vector<16x128xf32>
    %49 = arith.divf %48, %47 : vector<16x128xf32>
    %c0_32 = arith.constant 0 : index
    %c0_33 = arith.constant 0 : index
    %50 = vector.load %arg11[%c0_32, %c0_33] : memref<16x128xf32, #tpu.memory_space<vmem>>, vector<16x128xf32>
    tpu.vector_store %arg11[%c0_32, %c0_33], %49 {strides = array<i32>} : memref<16x128xf32, #tpu.memory_space<vmem>>, vector<16x128xf32>,
    return
  }
  func.func @transform_0(%arg0: i32) -> (i32, i32) {
    %c0_i32 = arith.constant 0 : i32
    %c0_i32_0 = arith.constant 0 : i32
    return %arg0, %c0_i32 : i32, i32
  }
  func.func @transform_1(%arg0: i32) -> (i32, i32) {
    %c0_i32 = arith.constant 0 : i32
    %c0_i32_0 = arith.constant 0 : i32
    return %arg0, %c0_i32 : i32, i32
  }
  func.func @transform_2(%arg0: i32) -> (i32, i32) {
    %c0_i32 = arith.constant 0 : i32
    %c0_i32_0 = arith.constant 0 : i32
    %c0_i32_1 = arith.constant 0 : i32
    return %c0_i32, %c0_i32_0 : i32, i32
  }
  func.func @transform_3(%arg0: i32) -> (i32, i32) {
    %c0_i32 = arith.constant 0 : i32
    %c0_i32_0 = arith.constant 0 : i32
    %c0_i32_1 = arith.constant 0 : i32
    return %c0_i32, %c0_i32_0 : i32, i32
  }
  func.func @transform_4(%arg0: i32) -> (i32, i32) {
    %c0_i32 = arith.constant 0 : i32
    %c0_i32_0 = arith.constant 0 : i32
    %c0_i32_1 = arith.constant 0 : i32
    return %c0_i32, %c0_i32_0 : i32, i32
  }
  func.func @transform_5(%arg0: i32) -> (i32, i32) {
    %c0_i32 = arith.constant 0 : i32
    %c0_i32_0 = arith.constant 0 : i32
    %c0_i32_1 = arith.constant 0 : i32
    return %c0_i32, %c0_i32_0 : i32, i32
  }
  func.func @transform_6(%arg0: i32) -> (i32, i32) {
    %c0_i32 = arith.constant 0 : i32
    %c0_i32_0 = arith.constant 0 : i32
    %c0_i32_1 = arith.constant 0 : i32
    return %c0_i32, %c0_i32_0 : i32, i32
  }
  func.func @transform_7(%arg0: i32) -> (i32, i32) {
    %c0_i32 = arith.constant 0 : i32
    %c0_i32_0 = arith.constant 0 : i32
    %c0_i32_1 = arith.constant 0 : i32
    return %c0_i32, %c0_i32_0 : i32, i32
  }
  func.func @transform_8(%arg0: i32) -> (i32, i32) {
    %c0_i32 = arith.constant 0 : i32
    %c0_i32_0 = arith.constant 0 : i32
    %c0_i32_1 = arith.constant 0 : i32
    return %c0_i32, %c0_i32_0 : i32, i32
  }
  func.func @transform_9(%arg0: i32) -> (i32, i32) {
    %c0_i32 = arith.constant 0 : i32
    %c0_i32_0 = arith.constant 0 : i32
    %c0_i32_1 = arith.constant 0 : i32
    return %c0_i32, %c0_i32_0 : i32, i32
  }
  func.func @transform_10(%arg0: i32) -> (i32, i32) {
    %c0_i32 = arith.constant 0 : i32
    %c0_i32_0 = arith.constant 0 : i32
    return %arg0, %c0_i32 : i32, i32
  }
  func.func @transform_11(%arg0: i32) -> (i32, i32) {
    %c0_i32 = arith.constant 0 : i32
    %c0_i32_0 = arith.constant 0 : i32
    return %arg0, %c0_i32 : i32, i32
  }
}

</mosaic_0001>

<llo_original>
// kernel: tpu_custom_call.1
$region0: #{tpu_custom_call.1}
  #allocation0 [shape = 'u32[]', space=smem, size = 0x4, offset = 0x4, fixed_abs, tag = 'smem constant byte address 0x4 - core index']
  #allocation1 [shape = 'u32[144,128]{1,0:T(1,128)}', space=vmem, size = 0x12000, scoped, tag = 'internal scratch']
  %s0 = inlined_call_operand.hbm [shape: bf16[16,128], index: 0, kind: input, shape index: {}]
  %s1 = inlined_call_operand.hbm [shape: bf16[16,128], index: 1, kind: input, shape index: {}]
  %s2 = inlined_call_operand.hbm [shape: bf16[128,128], index: 2, kind: input, shape index: {}]
  %s3 = inlined_call_operand.vmem [shape: f32[1,128], index: 3, kind: input, shape index: {}]
  %s4 = inlined_call_operand.hbm [shape: bf16[128,128], index: 4, kind: input, shape index: {}]
  %s5 = inlined_call_operand.vmem [shape: f32[1,128], index: 5, kind: input, shape index: {}]
  %s6 = inlined_call_operand.hbm [shape: bf16[128,128], index: 6, kind: input, shape index: {}]
  %s7 = inlined_call_operand.vmem [shape: f32[1,128], index: 7, kind: input, shape index: {}]
  %s8 = inlined_call_operand.hbm [shape: bf16[128,128], index: 8, kind: input, shape index: {}]
  %s9 = inlined_call_operand.vmem [shape: f32[1,128], index: 9, kind: input, shape index: {}]
  %s10 = inlined_call_operand.hbm [shape: f32[16,128], index: 10, kind: output, shape index: {0}]
  %s11 = inlined_call_operand.hbm [shape: f32[16,128], index: 11, kind: output, shape index: {1}]
  %12 = xla_tuple %s10, %s11
  %s13 = sld [smem:[#allocation0]]
  $region82: #{tpu_custom_call.1} parent=0
    _
  %s15 = ssub.s32 1, %s13
  %s16 = scalar_select 0, %s15, %s13
  $region1: #{tpu_custom_call.1} parent=0
    #allocation2 [shape = 'u8[4096]{0}', space=vmem, size = 0x1000, scoped, tag = 'input window, operand 0, single buffered']
    #allocation3 [shape = 's32[1]{0}', space=sflag, size = 0x4, scoped, tag = 'scoped memory for tpu_custom_call.1']
    #allocation4 [shape = 's32[1]{0}', space=sflag, size = 0x4, scoped, tag = 'scoped memory for tpu_custom_call.1']
    #allocation5 [shape = 'u8[4096]{0}', space=vmem, size = 0x1000, scoped, tag = 'input window, operand 1, single buffered']
    #allocation6 [shape = 's32[1]{0}', space=sflag, size = 0x4, scoped, tag = 'scoped memory for tpu_custom_call.1']
    #allocation7 [shape = 'u8[32768]{0}', space=vmem, size = 0x8000, scoped, tag = 'input window, operand 2, single buffered']
    #allocation8 [shape = 'u8[32768]{0}', space=vmem, size = 0x8000, scoped, tag = 'input window, operand 4, single buffered']
    #allocation9 [shape = 's32[1]{0}', space=sflag, size = 0x4, scoped, tag = 'scoped memory for tpu_custom_call.1']
    #allocation10 [shape = 'u8[32768]{0}', space=vmem, size = 0x8000, scoped, tag = 'input window, operand 6, single buffered']
    #allocation11 [shape = 'u8[32768]{0}', space=vmem, size = 0x8000, scoped, tag = 'input window, operand 8, single buffered']
    #allocation12 [shape = 's32[1]{0}', space=sflag, size = 0x4, scoped, tag = 'scoped memory for tpu_custom_call.1']
    #allocation13 [shape = 'u8[8192]{0}', space=vmem, size = 0x2000, scoped, tag = 'output window, operand 0, single buffered']
    #allocation14 [shape = 'u8[8192]{0}', space=vmem, size = 0x2000, scoped, tag = 'output window, operand 1, single buffered']
    #allocation15 [shape = 's32[1]{0}', space=sflag, size = 0x4, scoped, tag = 'scoped memory for tpu_custom_call.1']
    %17 = vsyncpa [#allocation3], 0
    %18 = vsyncpa [#allocation6], 0
    %19 = vsyncpa [#allocation9], 0
    %20 = vsyncpa [#allocation12], 0
    %21 = vsyncpa [#allocation4], 0
    %22 = vsyncpa [#allocation15], 0
    // Predicated region
    $region2: #{tpu_custom_call.1} parent=1 // pred_check
      _
    $region3: #{tpu_custom_call.1} parent=1 // pred_check_branch
      %24 = sbr.rel (0) target = $region5
    $region4: #{tpu_custom_call.1} parent=1 // pred_region
      %s26 = ssub.s32 128, 128
      %27 = vsyncadd [#allocation3], %s26
      %s28 = sshll.u32 [#allocation2], 4
      %s29 = int_to_ptr.vmem [resolvable:$true] %s28
      %34 = dma.hbm_to_vmem [thread:$0]  %s0, 128, %s29, [#allocation3], 64, 64, 4
    $region5: #{tpu_custom_call.1} parent=1 // pred_fallthru
      _
    // Predicated region
    $region6: #{tpu_custom_call.1} parent=1 // pred_check
      _
    $region7: #{tpu_custom_call.1} parent=1 // pred_check_branch
      %36 = sbr.rel (0) target = $region9
    $region8: #{tpu_custom_call.1} parent=1 // pred_region
      %s38 = ssub.s32 128, 128
      %39 = vsyncadd [#allocation6], %s38
      %s40 = sshll.u32 [#allocation5], 4
      %s41 = int_to_ptr.vmem [resolvable:$true] %s40
      %46 = dma.hbm_to_vmem [thread:$0]  %s1, 128, %s41, [#allocation6], 64, 64, 4
    $region9: #{tpu_custom_call.1} parent=1 // pred_fallthru
      _
    // Predicated region
    $region10: #{tpu_custom_call.1} parent=1 // pred_check
      _
    $region11: #{tpu_custom_call.1} parent=1 // pred_check_branch
      %48 = sbr.rel (0) target = $region13
    $region12: #{tpu_custom_call.1} parent=1 // pred_region
      %s50 = ssub.s32 1024, 1024
      %51 = vsyncadd [#allocation6], %s50
      %s52 = sshll.u32 [#allocation7], 4
      %s53 = int_to_ptr.vmem [resolvable:$true] %s52
      %58 = dma.hbm_to_vmem [thread:$0]  %s2, 1024, %s53, [#allocation6], 64, 64, 4
    $region13: #{tpu_custom_call.1} parent=1 // pred_fallthru
      _
    // Predicated region
    $region14: #{tpu_custom_call.1} parent=1 // pred_check
      _
    $region15: #{tpu_custom_call.1} parent=1 // pred_check_branch
      %60 = sbr.rel (0) target = $region17
    $region16: #{tpu_custom_call.1} parent=1 // pred_region
      _
    $region17: #{tpu_custom_call.1} parent=1 // pred_fallthru
      _
    // Predicated region
    $region18: #{tpu_custom_call.1} parent=1 // pred_check
      _
    $region19: #{tpu_custom_call.1} parent=1 // pred_check_branch
      %62 = sbr.rel (0) target = $region21
    $region20: #{tpu_custom_call.1} parent=1 // pred_region
      %s64 = ssub.s32 1024, 1024
      %65 = vsyncadd [#allocation9], %s64
      %s66 = sshll.u32 [#allocation8], 4
      %s67 = int_to_ptr.vmem [resolvable:$true] %s66
      %72 = dma.hbm_to_vmem [thread:$0]  %s4, 1024, %s67, [#allocation9], 64, 64, 4
    $region21: #{tpu_custom_call.1} parent=1 // pred_fallthru
      _
    // Predicated region
    $region22: #{tpu_custom_call.1} parent=1 // pred_check
      _
    $region23: #{tpu_custom_call.1} parent=1 // pred_check_branch
      %74 = sbr.rel (0) target = $region25
    $region24: #{tpu_custom_call.1} parent=1 // pred_region
      _
    $region25: #{tpu_custom_call.1} parent=1 // pred_fallthru
      _
    // Predicated region
    $region26: #{tpu_custom_call.1} parent=1 // pred_check
      _
    $region27: #{tpu_custom_call.1} parent=1 // pred_check_branch
      %76 = sbr.rel (0) target = $region29
    $region28: #{tpu_custom_call.1} parent=1 // pred_region
      %s78 = ssub.s32 1024, 1024
      %79 = vsyncadd [#allocation9], %s78
      %s80 = sshll.u32 [#allocation10], 4
      %s81 = int_to_ptr.vmem [resolvable:$true] %s80
      %86 = dma.hbm_to_vmem [thread:$0]  %s6, 1024, %s81, [#allocation9], 64, 64, 4
    $region29: #{tpu_custom_call.1} parent=1 // pred_fallthru
      _
    // Predicated region
    $region30: #{tpu_custom_call.1} parent=1 // pred_check
      _
    $region31: #{tpu_custom_call.1} parent=1 // pred_check_branch
      %88 = sbr.rel (0) target = $region33
    $region32: #{tpu_custom_call.1} parent=1 // pred_region
      _
    $region33: #{tpu_custom_call.1} parent=1 // pred_fallthru
      _
    // Predicated region
    $region34: #{tpu_custom_call.1} parent=1 // pred_check
      _
    $region35: #{tpu_custom_call.1} parent=1 // pred_check_branch
      %90 = sbr.rel (0) target = $region37
    $region36: #{tpu_custom_call.1} parent=1 // pred_region
      %s92 = ssub.s32 1024, 1024
      %93 = vsyncadd [#allocation12], %s92
      %s94 = sshll.u32 [#allocation11], 4
      %s95 = int_to_ptr.vmem [resolvable:$true] %s94
      %100 = dma.hbm_to_vmem [thread:$0]  %s8, 1024, %s95, [#allocation12], 64, 64, 4
    $region37: #{tpu_custom_call.1} parent=1 // pred_fallthru
      _
    // Predicated region
    $region38: #{tpu_custom_call.1} parent=1 // pred_check
      _
    $region39: #{tpu_custom_call.1} parent=1 // pred_check_branch
      %102 = sbr.rel (0) target = $region41
    $region40: #{tpu_custom_call.1} parent=1 // pred_region
      _
    $region41: #{tpu_custom_call.1} parent=1 // pred_fallthru
      _
    // Predicated region
    $region42: #{tpu_custom_call.1} parent=1 // pred_check
      _
    $region43: #{tpu_custom_call.1} parent=1 // pred_check_branch
      %104 = sbr.rel (0) target = $region45
    $region44: #{tpu_custom_call.1} parent=1 // pred_region
      %105 = dma.done [#allocation3], 128
    $region45: #{tpu_custom_call.1} parent=1 // pred_fallthru
      _
    // Predicated region
    $region46: #{tpu_custom_call.1} parent=1 // pred_check
      _
    $region47: #{tpu_custom_call.1} parent=1 // pred_check_branch
      %107 = sbr.rel (0) target = $region49
    $region48: #{tpu_custom_call.1} parent=1 // pred_region
      %108 = dma.done [#allocation6], 128
    $region49: #{tpu_custom_call.1} parent=1 // pred_fallthru
      _
    // Predicated region
    $region50: #{tpu_custom_call.1} parent=1 // pred_check
      _
    $region51: #{tpu_custom_call.1} parent=1 // pred_check_branch
      %110 = sbr.rel (0) target = $region53
    $region52: #{tpu_custom_call.1} parent=1 // pred_region
      %111 = dma.done [#allocation6], 1024
    $region53: #{tpu_custom_call.1} parent=1 // pred_fallthru
      _
    // Predicated region
    $region54: #{tpu_custom_call.1} parent=1 // pred_check
      _
    $region55: #{tpu_custom_call.1} parent=1 // pred_check_branch
      %113 = sbr.rel (0) target = $region57
    $region56: #{tpu_custom_call.1} parent=1 // pred_region
      %114 = dma.done [#allocation9], 1024
    $region57: #{tpu_custom_call.1} parent=1 // pred_fallthru
      _
    // Predicated region
    $region58: #{tpu_custom_call.1} parent=1 // pred_check
      _
    $region59: #{tpu_custom_call.1} parent=1 // pred_check_branch
      %116 = sbr.rel (0) target = $region61
    $region60: #{tpu_custom_call.1} parent=1 // pred_region
      %117 = dma.done [#allocation9], 1024
    $region61: #{tpu_custom_call.1} parent=1 // pred_fallthru
      _
    // Predicated region
    $region62: #{tpu_custom_call.1} parent=1 // pred_check
      _
    $region63: #{tpu_custom_call.1} parent=1 // pred_check_branch
      %119 = sbr.rel (0) target = $region65
    $region64: #{tpu_custom_call.1} parent=1 // pred_region
      %120 = dma.done [#allocation12], 1024
    $region65: #{tpu_custom_call.1} parent=1 // pred_fallthru
      _
    %v122 = vld [vmem:[#allocation2] sm:$0xf]
    %v123 = vld [vmem:[#allocation2 + $0x4] sm:$0xf]
    %v124 = vld [vmem:[#allocation7] sm:$0xf]
    %v125 = vld [vmem:[#allocation7 + $0x4] sm:$0xf]
    %v126 = vld [vmem:[#allocation7 + $0x8] sm:$0xf]
    %v127 = vld [vmem:[#allocation7 + $0xc] sm:$0xf]
    %v128 = vld [vmem:[#allocation7 + $0x10] sm:$0xf]
    %v129 = vld [vmem:[#allocation7 + $0x14] sm:$0xf]
    %v130 = vld [vmem:[#allocation7 + $0x18] sm:$0xf]
    %v131 = vld [vmem:[#allocation7 + $0x1c] sm:$0xf]
    %v132 = vld [vmem:[#allocation7 + $0x20] sm:$0xf]
    %v133 = vld [vmem:[#allocation7 + $0x24] sm:$0xf]
    %v134 = vld [vmem:[#allocation7 + $0x28] sm:$0xf]
    %v135 = vld [vmem:[#allocation7 + $0x2c] sm:$0xf]
    %v136 = vld [vmem:[#allocation7 + $0x30] sm:$0xf]
    %v137 = vld [vmem:[#allocation7 + $0x34] sm:$0xf]
    %v138 = vld [vmem:[#allocation7 + $0x38] sm:$0xf]
    %v139 = vld [vmem:[#allocation7 + $0x3c] sm:$0xf]
    %v140 = vld [vmem:[%s3] sm:$0x1]
    %v142 = vlaneseq
    %v143 = vshrl.u32 %v142, 7
    %v144 = vsub.s32 0, %v143
    %v145 = vrot.slane %v140, %v144
    %v149 = vunpack.c.l.b16 %v122
    %v150 = vunpack.c.l.b16 %v123
    %v151 = vpack.c.b16 %v150, %v149
    %v169 = vunpack.c.l.b16 %v124
    %v170 = vunpack.c.l.b16 %v125
    %v171 = vunpack.c.l.b16 %v126
    %v172 = vunpack.c.l.b16 %v127
    %v173 = vunpack.c.l.b16 %v128
    %v174 = vunpack.c.l.b16 %v129
    %v175 = vunpack.c.l.b16 %v130
    %v176 = vunpack.c.l.b16 %v131
    %v177 = vunpack.c.l.b16 %v132
    %v178 = vunpack.c.l.b16 %v133
    %v179 = vunpack.c.l.b16 %v134
    %v180 = vunpack.c.l.b16 %v135
    %v181 = vunpack.c.l.b16 %v136
    %v182 = vunpack.c.l.b16 %v137
    %v183 = vunpack.c.l.b16 %v138
    %v184 = vunpack.c.l.b16 %v139
    %v185 = vpack.c.b16 %v170, %v169
    %v186 = vpack.c.b16 %v172, %v171
    %v187 = vpack.c.b16 %v174, %v173
    %v188 = vpack.c.b16 %v176, %v175
    %v189 = vpack.c.b16 %v178, %v177
    %v190 = vpack.c.b16 %v180, %v179
    %v191 = vpack.c.b16 %v182, %v181
    %v192 = vpack.c.b16 %v184, %v183
    %201 = vmatprep.subr.bf16.mxu0 0
    %202 = vmatpush1.bf16.msra.mxu0 %v192
    %203 = vmatprep.subr.bf16.mxu0 0
    %204 = vmatpush1.bf16.msra.mxu0 %v191
    %205 = vmatprep.subr.bf16.mxu0 0
    %206 = vmatpush1.bf16.msra.mxu0 %v190
    %207 = vmatprep.subr.bf16.mxu0 0
    %208 = vmatpush1.bf16.msra.mxu0 %v189
    %209 = vmatprep.subr.bf16.mxu0 0
    %210 = vmatpush1.bf16.msra.mxu0 %v188
    %211 = vmatprep.subr.bf16.mxu0 0
    %212 = vmatpush1.bf16.msra.mxu0 %v187
    %213 = vmatprep.subr.bf16.mxu0 0
    %214 = vmatpush1.bf16.msra.mxu0 %v186
    %215 = vmatprep.subr.bf16.mxu0 0
    %216 = vmatpush1.bf16.msra.mxu0 %v185
    %217 = vmatprep.subr.bf16.mxu0 0
    %218 = vmatpush2.bf16.msra.mxu0 0
    %219 = vmatprep.subr.bf16.mxu0 0
    %220 = vmatpush2.bf16.msra.mxu0 0
    %221 = vmatprep.subr.bf16.mxu0 0
    %222 = vmatpush2.bf16.msra.mxu0 0
    %223 = vmatprep.subr.bf16.mxu0 0
    %224 = vmatpush2.bf16.msra.mxu0 0
    %225 = vmatprep.subr.bf16.mxu0 0
    %226 = vmatpush2.bf16.msra.mxu0 0
    %227 = vmatprep.subr.bf16.mxu0 0
    %228 = vmatpush2.bf16.msra.mxu0 0
    %229 = vmatprep.subr.bf16.mxu0 0
    %230 = vmatpush2.bf16.msra.mxu0 0
    %231 = vmatprep.subr.bf16.mxu0 0
    %232 = vmatpush2.bf16.msra.mxu0 0
    %233 = vmatprep.mubr.bf16.mxu0 0
    %234 = vmatmul.mubr.bf16.gmra.mxu0 %v151
    %v235 = vpop.f32.mrf.mxu0
    %v236 = vadd.f32 %v145, %v235
    %v237 = vpop.f32.mrf.mxu0
    %v238 = vpop.f32.mrf.mxu0
    %v239 = vadd.f32 %v145, %v238
    %v240 = vpop.f32.mrf.mxu0
    %241 = vdwg.mxu0
    %v242 = vmax.f32 %v236, 0.0
    %v243 = vmax.f32 %v239, 0.0
    %v244 = vpack.c.bf16 %v243, %v242
    %v245 = vld [vmem:[#allocation8] sm:$0xf]
    %v246 = vld [vmem:[#allocation8 + $0x4] sm:$0xf]
    %v247 = vld [vmem:[#allocation8 + $0x8] sm:$0xf]
    %v248 = vld [vmem:[#allocation8 + $0xc] sm:$0xf]
    %v249 = vld [vmem:[#allocation8 + $0x10] sm:$0xf]
    %v250 = vld [vmem:[#allocation8 + $0x14] sm:$0xf]
    %v251 = vld [vmem:[#allocation8 + $0x18] sm:$0xf]
    %v252 = vld [vmem:[#allocation8 + $0x1c] sm:$0xf]
    %v253 = vld [vmem:[#allocation8 + $0x20] sm:$0xf]
    %v254 = vld [vmem:[#allocation8 + $0x24] sm:$0xf]
    %v255 = vld [vmem:[#allocation8 + $0x28] sm:$0xf]
    %v256 = vld [vmem:[#allocation8 + $0x2c] sm:$0xf]
    %v257 = vld [vmem:[#allocation8 + $0x30] sm:$0xf]
    %v258 = vld [vmem:[#allocation8 + $0x34] sm:$0xf]
    %v259 = vld [vmem:[#allocation8 + $0x38] sm:$0xf]
    %v260 = vld [vmem:[#allocation8 + $0x3c] sm:$0xf]
    %v261 = vld [vmem:[%s5] sm:$0x1]
    %v263 = vlaneseq
    %v264 = vshrl.u32 %v263, 7
    %v265 = vsub.s32 0, %v264
    %v266 = vrot.slane %v261, %v265
    %v284 = vunpack.c.l.b16 %v245
    %v285 = vunpack.c.l.b16 %v246
    %v286 = vunpack.c.l.b16 %v247
    %v287 = vunpack.c.l.b16 %v248
    %v288 = vunpack.c.l.b16 %v249
    %v289 = vunpack.c.l.b16 %v250
    %v290 = vunpack.c.l.b16 %v251
    %v291 = vunpack.c.l.b16 %v252
    %v292 = vunpack.c.l.b16 %v253
    %v293 = vunpack.c.l.b16 %v254
    %v294 = vunpack.c.l.b16 %v255
    %v295 = vunpack.c.l.b16 %v256
    %v296 = vunpack.c.l.b16 %v257
    %v297 = vunpack.c.l.b16 %v258
    %v298 = vunpack.c.l.b16 %v259
    %v299 = vunpack.c.l.b16 %v260
    %v300 = vpack.c.b16 %v285, %v284
    %v301 = vpack.c.b16 %v287, %v286
    %v302 = vpack.c.b16 %v289, %v288
    %v303 = vpack.c.b16 %v291, %v290
    %v304 = vpack.c.b16 %v293, %v292
    %v305 = vpack.c.b16 %v295, %v294
    %v306 = vpack.c.b16 %v297, %v296
    %v307 = vpack.c.b16 %v299, %v298
    %316 = vmatprep.subr.bf16.mxu0 0
    %317 = vmatpush1.bf16.msra.mxu0 %v307
    %318 = vmatprep.subr.bf16.mxu0 0
    %319 = vmatpush1.bf16.msra.mxu0 %v306
    %320 = vmatprep.subr.bf16.mxu0 0
    %321 = vmatpush1.bf16.msra.mxu0 %v305
    %322 = vmatprep.subr.bf16.mxu0 0
    %323 = vmatpush1.bf16.msra.mxu0 %v304
    %324 = vmatprep.subr.bf16.mxu0 0
    %325 = vmatpush1.bf16.msra.mxu0 %v303
    %326 = vmatprep.subr.bf16.mxu0 0
    %327 = vmatpush1.bf16.msra.mxu0 %v302
    %328 = vmatprep.subr.bf16.mxu0 0
    %329 = vmatpush1.bf16.msra.mxu0 %v301
    %330 = vmatprep.subr.bf16.mxu0 0
    %331 = vmatpush1.bf16.msra.mxu0 %v300
    %332 = vmatprep.subr.bf16.mxu0 0
    %333 = vmatpush2.bf16.msra.mxu0 0
    %334 = vmatprep.subr.bf16.mxu0 0
    %335 = vmatpush2.bf16.msra.mxu0 0
    %336 = vmatprep.subr.bf16.mxu0 0
    %337 = vmatpush2.bf16.msra.mxu0 0
    %338 = vmatprep.subr.bf16.mxu0 0
    %339 = vmatpush2.bf16.msra.mxu0 0
    %340 = vmatprep.subr.bf16.mxu0 0
    %341 = vmatpush2.bf16.msra.mxu0 0
    %342 = vmatprep.subr.bf16.mxu0 0
    %343 = vmatpush2.bf16.msra.mxu0 0
    %344 = vmatprep.subr.bf16.mxu0 0
    %345 = vmatpush2.bf16.msra.mxu0 0
    %346 = vmatprep.subr.bf16.mxu0 0
    %347 = vmatpush2.bf16.msra.mxu0 0
    %348 = vmatprep.mubr.bf16.mxu0 0
    %349 = vmatmul.mubr.bf16.gmra.mxu0 %v244
    %v350 = vpop.f32.mrf.mxu0
    %v351 = vadd.f32 %v266, %v350
    %v352 = vpop.f32.mrf.mxu0
    %v353 = vpop.f32.mrf.mxu0
    %v354 = vadd.f32 %v266, %v353
    %v355 = vpop.f32.mrf.mxu0
    %356 = vdwg.mxu0
    %357 = vst [vmem:[#allocation14] sm:$0xff] %v351
    %358 = vst [vmem:[#allocation14 + $0x8] sm:$0xff] %v354
    %v359 = vlaneseq
    %v360 = vand.u32 %v359, 127
    %vm361 = vcmp.lt.s32.totalorder %v360, 16
    %v362 = vsel %vm361, %v351, 0.0
    %v363 = vsel %vm361, %v354, 0.0
    %v364 = vsel %vm361, 0.0, %v351
    %v365 = vsel %vm361, 0.0, %v354
    %v366 = vmul.f32 %v364, 0.5
    %v367 = vmul.f32 %v365, 0.5
    %v368 = vmul.f32 %v366, 1.442695
    %v369 = vpow.pop %v368
    %v370 = vmul.f32 %v367, 1.442695
    %v371 = vpow.pop %v370
    %v372 = vld [vmem:[#allocation5] sm:$0xf]
    %v373 = vld [vmem:[#allocation5 + $0x4] sm:$0xf]
    %v374 = vunpack.c.l.bf16 %v372
    %v375 = vunpack.c.l.bf16 %v373
    %v376 = vmul.f32 %v374, %v369
    %v377 = vmul.f32 %v375, %v371
    %v378 = vadd.f32 %v362, %v376
    %v379 = vadd.f32 %v363, %v377
    %v380 = vpack.c.bf16 %v379, %v378
    %v381 = vld [vmem:[#allocation10] sm:$0xf]
    %v382 = vld [vmem:[#allocation10 + $0x4] sm:$0xf]
    %v383 = vld [vmem:[#allocation10 + $0x8] sm:$0xf]
    %v384 = vld [vmem:[#allocation10 + $0xc] sm:$0xf]
    %v385 = vld [vmem:[#allocation10 + $0x10] sm:$0xf]
    %v386 = vld [vmem:[#allocation10 + $0x14] sm:$0xf]
    %v387 = vld [vmem:[#allocation10 + $0x18] sm:$0xf]
    %v388 = vld [vmem:[#allocation10 + $0x1c] sm:$0xf]
    %v389 = vld [vmem:[#allocation10 + $0x20] sm:$0xf]
    %v390 = vld [vmem:[#allocation10 + $0x24] sm:$0xf]
    %v391 = vld [vmem:[#allocation10 + $0x28] sm:$0xf]
    %v392 = vld [vmem:[#allocation10 + $0x2c] sm:$0xf]
    %v393 = vld [vmem:[#allocation10 + $0x30] sm:$0xf]
    %v394 = vld [vmem:[#allocation10 + $0x34] sm:$0xf]
    %v395 = vld [vmem:[#allocation10 + $0x38] sm:$0xf]
    %v396 = vld [vmem:[#allocation10 + $0x3c] sm:$0xf]
    %v397 = vld [vmem:[%s7] sm:$0x1]
    %v399 = vlaneseq
    %v400 = vshrl.u32 %v399, 7
    %v401 = vsub.s32 0, %v400
    %v402 = vrot.slane %v397, %v401
    %v420 = vunpack.c.l.b16 %v381
    %v421 = vunpack.c.l.b16 %v382
    %v422 = vunpack.c.l.b16 %v383
    %v423 = vunpack.c.l.b16 %v384
    %v424 = vunpack.c.l.b16 %v385
    %v425 = vunpack.c.l.b16 %v386
    %v426 = vunpack.c.l.b16 %v387
    %v427 = vunpack.c.l.b16 %v388
    %v428 = vunpack.c.l.b16 %v389
    %v429 = vunpack.c.l.b16 %v390
    %v430 = vunpack.c.l.b16 %v391
    %v431 = vunpack.c.l.b16 %v392
    %v432 = vunpack.c.l.b16 %v393
    %v433 = vunpack.c.l.b16 %v394
    %v434 = vunpack.c.l.b16 %v395
    %v435 = vunpack.c.l.b16 %v396
    %v436 = vpack.c.b16 %v421, %v420
    %v437 = vpack.c.b16 %v423, %v422
    %v438 = vpack.c.b16 %v425, %v424
    %v439 = vpack.c.b16 %v427, %v426
    %v440 = vpack.c.b16 %v429, %v428
    %v441 = vpack.c.b16 %v431, %v430
    %v442 = vpack.c.b16 %v433, %v432
    %v443 = vpack.c.b16 %v435, %v434
    %452 = vmatprep.subr.bf16.mxu0 0
    %453 = vmatpush1.bf16.msra.mxu0 %v443
    %454 = vmatprep.subr.bf16.mxu0 0
    %455 = vmatpush1.bf16.msra.mxu0 %v442
    %456 = vmatprep.subr.bf16.mxu0 0
    %457 = vmatpush1.bf16.msra.mxu0 %v441
    %458 = vmatprep.subr.bf16.mxu0 0
    %459 = vmatpush1.bf16.msra.mxu0 %v440
    %460 = vmatprep.subr.bf16.mxu0 0
    %461 = vmatpush1.bf16.msra.mxu0 %v439
    %462 = vmatprep.subr.bf16.mxu0 0
    %463 = vmatpush1.bf16.msra.mxu0 %v438
    %464 = vmatprep.subr.bf16.mxu0 0
    %465 = vmatpush1.bf16.msra.mxu0 %v437
    %466 = vmatprep.subr.bf16.mxu0 0
    %467 = vmatpush1.bf16.msra.mxu0 %v436
    %468 = vmatprep.subr.bf16.mxu0 0
    %469 = vmatpush2.bf16.msra.mxu0 0
    %470 = vmatprep.subr.bf16.mxu0 0
    %471 = vmatpush2.bf16.msra.mxu0 0
    %472 = vmatprep.subr.bf16.mxu0 0
    %473 = vmatpush2.bf16.msra.mxu0 0
    %474 = vmatprep.subr.bf16.mxu0 0
    %475 = vmatpush2.bf16.msra.mxu0 0
    %476 = vmatprep.subr.bf16.mxu0 0
    %477 = vmatpush2.bf16.msra.mxu0 0
    %478 = vmatprep.subr.bf16.mxu0 0
    %479 = vmatpush2.bf16.msra.mxu0 0
    %480 = vmatprep.subr.bf16.mxu0 0
    %481 = vmatpush2.bf16.msra.mxu0 0
    %482 = vmatprep.subr.bf16.mxu0 0
    %483 = vmatpush2.bf16.msra.mxu0 0
    %484 = vmatprep.mubr.bf16.mxu0 0
    %485 = vmatmul.mubr.bf16.gmra.mxu0 %v380
    %v486 = vpop.f32.mrf.mxu0
    %v487 = vadd.f32 %v402, %v486
    %v488 = vpop.f32.mrf.mxu0
    %v489 = vpop.f32.mrf.mxu0
    %v490 = vadd.f32 %v402, %v489
    %v491 = vpop.f32.mrf.mxu0
    %492 = vdwg.mxu0
    %v493 = vmax.f32 %v487, 0.0
    %v494 = vmax.f32 %v490, 0.0
    %v495 = vpack.c.bf16 %v494, %v493
    %v496 = vld [vmem:[#allocation11] sm:$0xf]
    %v497 = vld [vmem:[#allocation11 + $0x4] sm:$0xf]
    %v498 = vld [vmem:[#allocation11 + $0x8] sm:$0xf]
    %v499 = vld [vmem:[#allocation11 + $0xc] sm:$0xf]
    %v500 = vld [vmem:[#allocation11 + $0x10] sm:$0xf]
    %v501 = vld [vmem:[#allocation11 + $0x14] sm:$0xf]
    %v502 = vld [vmem:[#allocation11 + $0x18] sm:$0xf]
    %v503 = vld [vmem:[#allocation11 + $0x1c] sm:$0xf]
    %v504 = vld [vmem:[#allocation11 + $0x20] sm:$0xf]
    %v505 = vld [vmem:[#allocation11 + $0x24] sm:$0xf]
    %v506 = vld [vmem:[#allocation11 + $0x28] sm:$0xf]
    %v507 = vld [vmem:[#allocation11 + $0x2c] sm:$0xf]
    %v508 = vld [vmem:[#allocation11 + $0x30] sm:$0xf]
    %v509 = vld [vmem:[#allocation11 + $0x34] sm:$0xf]
    %v510 = vld [vmem:[#allocation11 + $0x38] sm:$0xf]
    %v511 = vld [vmem:[#allocation11 + $0x3c] sm:$0xf]
    %v512 = vld [vmem:[%s9] sm:$0x1]
    %v514 = vlaneseq
    %v515 = vshrl.u32 %v514, 7
    %v516 = vsub.s32 0, %v515
    %v517 = vrot.slane %v512, %v516
    %v535 = vunpack.c.l.b16 %v496
    %v536 = vunpack.c.l.b16 %v497
    %v537 = vunpack.c.l.b16 %v498
    %v538 = vunpack.c.l.b16 %v499
    %v539 = vunpack.c.l.b16 %v500
    %v540 = vunpack.c.l.b16 %v501
    %v541 = vunpack.c.l.b16 %v502
    %v542 = vunpack.c.l.b16 %v503
    %v543 = vunpack.c.l.b16 %v504
    %v544 = vunpack.c.l.b16 %v505
    %v545 = vunpack.c.l.b16 %v506
    %v546 = vunpack.c.l.b16 %v507
    %v547 = vunpack.c.l.b16 %v508
    %v548 = vunpack.c.l.b16 %v509
    %v549 = vunpack.c.l.b16 %v510
    %v550 = vunpack.c.l.b16 %v511
    %v551 = vpack.c.b16 %v536, %v535
    %v552 = vpack.c.b16 %v538, %v537
    %v553 = vpack.c.b16 %v540, %v539
    %v554 = vpack.c.b16 %v542, %v541
    %v555 = vpack.c.b16 %v544, %v543
    %v556 = vpack.c.b16 %v546, %v545
    %v557 = vpack.c.b16 %v548, %v547
    %v558 = vpack.c.b16 %v550, %v549
    %567 = vmatprep.subr.bf16.mxu0 0
    %568 = vmatpush1.bf16.msra.mxu0 %v558
    %569 = vmatprep.subr.bf16.mxu0 0
    %570 = vmatpush1.bf16.msra.mxu0 %v557
    %571 = vmatprep.subr.bf16.mxu0 0
    %572 = vmatpush1.bf16.msra.mxu0 %v556
    %573 = vmatprep.subr.bf16.mxu0 0
    %574 = vmatpush1.bf16.msra.mxu0 %v555
    %575 = vmatprep.subr.bf16.mxu0 0
    %576 = vmatpush1.bf16.msra.mxu0 %v554
    %577 = vmatprep.subr.bf16.mxu0 0
    %578 = vmatpush1.bf16.msra.mxu0 %v553
    %579 = vmatprep.subr.bf16.mxu0 0
    %580 = vmatpush1.bf16.msra.mxu0 %v552
    %581 = vmatprep.subr.bf16.mxu0 0
    %582 = vmatpush1.bf16.msra.mxu0 %v551
    %583 = vmatprep.subr.bf16.mxu0 0
    %584 = vmatpush2.bf16.msra.mxu0 0
    %585 = vmatprep.subr.bf16.mxu0 0
    %586 = vmatpush2.bf16.msra.mxu0 0
    %587 = vmatprep.subr.bf16.mxu0 0
    %588 = vmatpush2.bf16.msra.mxu0 0
    %589 = vmatprep.subr.bf16.mxu0 0
    %590 = vmatpush2.bf16.msra.mxu0 0
    %591 = vmatprep.subr.bf16.mxu0 0
    %592 = vmatpush2.bf16.msra.mxu0 0
    %593 = vmatprep.subr.bf16.mxu0 0
    %594 = vmatpush2.bf16.msra.mxu0 0
    %595 = vmatprep.subr.bf16.mxu0 0
    %596 = vmatpush2.bf16.msra.mxu0 0
    %597 = vmatprep.subr.bf16.mxu0 0
    %598 = vmatpush2.bf16.msra.mxu0 0
    %599 = vmatprep.mubr.bf16.mxu0 0
    %600 = vmatmul.mubr.bf16.gmra.mxu0 %v495
    %v601 = vpop.f32.mrf.mxu0
    %v602 = vadd.f32 %v517, %v601
    %v603 = vpop.f32.mrf.mxu0
    %v604 = vpop.f32.mrf.mxu0
    %v605 = vadd.f32 %v517, %v604
    %v606 = vpop.f32.mrf.mxu0
    %607 = vdwg.mxu0
    %v608 = vsub.f32 0.0, %v602
    %v609 = vsub.f32 0.0, %v605
    %v610 = vmul.f32 %v608, 1.442695
    %v611 = vpow.pop %v610
    %v612 = vmul.f32 %v609, 1.442695
    %v613 = vpow.pop %v612
    %v614 = vadd.f32 %v611, 1.0
    %v615 = vadd.f32 %v613, 1.0
    %v616 = vrcp.pop %v614
    %v617 = vmul.f32 1.0, %v616
    %v618 = vrcp.pop %v615
    %v619 = vmul.f32 1.0, %v618
    %620 = vst [vmem:[#allocation13] sm:$0xff] %v617
    %621 = vst [vmem:[#allocation13 + $0x8] sm:$0xff] %v619
    // Predicated region
    $region66: #{tpu_custom_call.1} parent=1 // pred_check
      _
    $region67: #{tpu_custom_call.1} parent=1 // pred_check_branch
      %623 = sbr.rel (0) target = $region69
    $region68: #{tpu_custom_call.1} parent=1 // pred_region
      %s625 = ssub.s32 256, 256
      %626 = vsyncadd [#allocation4], %s625
      %s627 = sshll.u32 [#allocation13], 4
      %s628 = int_to_ptr.vmem [resolvable:$true] %s627
      %633 = dma.vmem_to_hbm [thread:$0]  %s628, 256, %s10, [#allocation4], 128, 128, 8
    $region69: #{tpu_custom_call.1} parent=1 // pred_fallthru
      _
    // Predicated region
    $region70: #{tpu_custom_call.1} parent=1 // pred_check
      _
    $region71: #{tpu_custom_call.1} parent=1 // pred_check_branch
      %635 = sbr.rel (0) target = $region73
    $region72: #{tpu_custom_call.1} parent=1 // pred_region
      %s637 = ssub.s32 256, 256
      %638 = vsyncadd [#allocation15], %s637
      %s639 = sshll.u32 [#allocation14], 4
      %s640 = int_to_ptr.vmem [resolvable:$true] %s639
      %645 = dma.vmem_to_hbm [thread:$0]  %s640, 256, %s11, [#allocation15], 128, 128, 8
    $region73: #{tpu_custom_call.1} parent=1 // pred_fallthru
      _
    // Predicated region
    $region74: #{tpu_custom_call.1} parent=1 // pred_check
      _
    $region75: #{tpu_custom_call.1} parent=1 // pred_check_branch
      %647 = sbr.rel (0) target = $region77
    $region76: #{tpu_custom_call.1} parent=1 // pred_region
      %648 = dma.done [#allocation4], 256
    $region77: #{tpu_custom_call.1} parent=1 // pred_fallthru
      _
    // Predicated region
    $region78: #{tpu_custom_call.1} parent=1 // pred_check
      _
    $region79: #{tpu_custom_call.1} parent=1 // pred_check_branch
      %650 = sbr.rel (0) target = $region81
    $region80: #{tpu_custom_call.1} parent=1 // pred_region
      %651 = dma.done [#allocation15], 256
    $region81: #{tpu_custom_call.1} parent=1 // pred_fallthru
      _
    %652 = vsyncpa [#allocation3], 1
    %653 = vsyncpa [#allocation6], 1
    %654 = vsyncpa [#allocation9], 1
    %655 = vsyncpa [#allocation12], 1
    %656 = vsyncpa [#allocation4], 1
    %657 = vsyncpa [#allocation15], 1

</llo_original>
